<compile_context>
chip_gen: v6e
topology: v6e:2x2x1
jax: 0.10.0
libtpu: 0.0.40
codegen_flags: <defaults>
</compile_context>

<pallas_src>
import functools

import jax
import jax.numpy as jnp
import numpy as np
from jax.experimental import pallas as pl
from jax.experimental.pallas import tpu as pltpu

LANES = 128
SUBLANES = 8
CHUNK_ROWS = 512                       # rows per in-kernel VPU chunk (256 KiB f32)
VMEM_LIMIT_BYTES = 32 * 1024 * 1024    # plenty for 2 streams x 2 buffers x 4 MiB


def _detect_num_splits():
    """2 splits on two-TensorCore chips (v7x-class), 1 on single-TC v5e/v6e."""
    try:
        kind = jax.devices()[0].device_kind.lower()
    except Exception:
        return 1
    return 2 if "v7" in kind else 1


NUM_SPLITS = _detect_num_splits()
# ~2 MiB per image stream per grid step (measured ~85%-of-roofline regime);
# ~4 MiB on v7x where per-block transfer time is halved by the higher HBM BW.
# NOTE(v7x): if xprof shows both splits landing on one TC, switch grid axis 0
# to pltpu.CORE_PARALLEL; plain "parallel" is kept here as the known-safe path.
TARGET_BLOCK_BYTES = (4 if NUM_SPLITS == 2 else 2) * 1024 * 1024


def _round_up(a, b):
    return (a + b - 1) // b * b


def _vae_loss_kernel(recon_ref, x_ref, mu_ref, logvar_ref, out_ref, acc_ref, *,
                     tile_r, rows_valid, blocks_per_split):
    """Grid = (num_splits, blocks_per_split); axis 1 is the reduction axis.

    recon/x   : (tile_r, 128) image blocks, native dtype.
    mu/logvar : full padded latent slabs, constant index_map (fetched once).
    out_ref   : (8, 128) per-split block: [0,0] = raw SSE partial,
                [0,1] = raw KLD sum (written by split 0 only).
    acc_ref   : (8, 128) f32 scratch -- per-lane SSE accumulator.
    """
    c = pl.program_id(0)                       # split (TensorCore) index
    j = pl.program_id(1)                       # image-block index within split
    last_j = pl.num_programs(1) - 1

    @pl.when(j == 0)
    def _init():
        acc_ref[...] = jnp.zeros_like(acc_ref)

    g = c * blocks_per_split + j               # global (unclamped) block id
    block_rows = rows_valid - g * tile_r       # rows of this block holding real data

    def _accumulate(mask_rows):
        # Chunked so live f32 intermediates stay small however large tile_r is.
        for r0 in range(0, tile_r, CHUNK_ROWS):
            cr = min(CHUNK_ROWS, tile_r - r0)
            d = (recon_ref[pl.ds(r0, cr), :].astype(jnp.float32)
                 - x_ref[pl.ds(r0, cr), :].astype(jnp.float32))
            dsq = d * d
            if mask_rows:
                rid = jax.lax.broadcasted_iota(jnp.int32, (cr, LANES), 0) + r0
                # Keep a true select: garbage rows of a partial block may be
                # non-finite; select (not multiply) makes that harmless.
                dsq = jnp.where(rid < block_rows, dsq, 0.0)
            acc_ref[...] += jnp.sum(
                dsq.reshape(cr // SUBLANES, SUBLANES, LANES), axis=0)

    # Hot path: full in-range block -> cast/sub/mul/grouped-add only (no mask).
    @pl.when(block_rows >= tile_r)
    def _full_block():
        _accumulate(False)

    # Cold path: final partial block and any clamped overshoot block.
    @pl.when(block_rows < tile_r)
    def _partial_block():
        _accumulate(True)

    # Finalize this split: one cross-lane reduce.
    @pl.when(j == last_j)
    def _finalize_mse():
        row = jax.lax.broadcasted_iota(jnp.int32, (SUBLANES, LANES), 0)
        col = jax.lax.broadcasted_iota(jnp.int32, (SUBLANES, LANES), 1)
        sse = jnp.sum(acc_ref[...])
        out_ref[...] = jnp.where((row == 0) & (col == 0), sse, 0.0)

    # KLD is computed exactly once (split 0); wrapper only reads split 0's lane.
    @pl.when((j == last_j) & (c == 0))
    def _finalize_kld():
        row = jax.lax.broadcasted_iota(jnp.int32, (SUBLANES, LANES), 0)
        col = jax.lax.broadcasted_iota(jnp.int32, (SUBLANES, LANES), 1)
        mu_f = mu_ref[...].astype(jnp.float32)
        lv_f = logvar_ref[...].astype(jnp.float32)
        # Zero padding contributes 1 + 0 - 0 - exp(0) = 0 exactly.
        kld_sum = jnp.sum(1.0 + lv_f - mu_f * mu_f - jnp.exp(lv_f))
        out_ref[...] += jnp.where((row == 0) & (col == 1), kld_sum, 0.0)


def _prep_image(a):
    """Flatten to a (rows, 128) slab in the NATIVE dtype plus an optional tail.

    Lane-aligned sizes (the common case) are a pure zero-copy reshape.  For a
    lane-unaligned size only the <128-element tail is split off for a tiny jnp
    reduction in the wrapper -- no full-array pad pass.
    """
    flat = a.reshape(-1)
    n = flat.shape[0]
    rows = n // LANES
    n_main = rows * LANES
    if n_main == n:
        return flat.reshape(rows, LANES), None
    # TODO(synk): XLA may still materialize this prefix slice for unaligned n;
    # a fully copy-free path would need a manual 1-D DMA.
    return flat[:n_main].reshape(rows, LANES), flat[n_main:]


def _prep_latent(a):
    """Latents are tiny (batch x z): pad to a full (8k, 128) slab (padding is an
    exact no-op for the KLD sum)."""
    flat = a.reshape(-1)
    n = flat.shape[0]
    rows = _round_up(pl.cdiv(n, LANES), SUBLANES)
    if rows * LANES != n:
        flat = jnp.pad(flat, (0, rows * LANES - n))
    return flat.reshape(rows, LANES)


@jax.jit
def vae_loss(reconstructed_inputs, inputs, mu, logvar):
    """Returns (MSE + KLD, MSE, KLD) matching the PyTorch VAE_loss.forward."""
    assert reconstructed_inputs.size == inputs.size, "image sizes must match"
    assert mu.size == logvar.size, "mu and logvar must match in size"

    n_x = reconstructed_inputs.size
    n_z = mu.size

    recon_slab, recon_tail = _prep_image(reconstructed_inputs)
    x_slab, x_tail = _prep_image(inputs)
    rows = recon_slab.shape[0]

    mu_slab = _prep_latent(mu)
    lv_slab = _prep_latent(logvar)
    rows_z = mu_slab.shape[0]

    if rows < SUBLANES:
        # TODO(synk): sub-1024-element images are not worth a kernel launch;
        # degenerate tiny-input case stays in plain XLA.
        mse = jnp.mean((reconstructed_inputs.astype(jnp.float32)
                        - inputs.astype(jnp.float32)) ** 2)
        kld = -0.5 * jnp.mean(1.0 + logvar.astype(jnp.float32)
                              - mu.astype(jnp.float32) ** 2
                              - jnp.exp(logvar.astype(jnp.float32)))
        return mse + kld, mse, kld

    # ---- static tiling config (all shape-derived, no scalar prefetch) -----
    itemsize = recon_slab.dtype.itemsize
    tile_r_max = max(SUBLANES,
                     (TARGET_BLOCK_BYTES // (LANES * itemsize))
                     // SUBLANES * SUBLANES)
    tile_r = min(tile_r_max, rows // SUBLANES * SUBLANES)   # multiple of 8
    num_blocks = pl.cdiv(rows, tile_r)
    num_splits = max(1, min(NUM_SPLITS, num_blocks))
    bps = pl.cdiv(num_blocks, num_splits)                   # blocks per split
    last_block = num_blocks - 1

    def img_map(c, j):
        # Clamp so overshoot blocks (fully masked in-kernel) never DMA OOB.
        return (jnp.minimum(c * bps + j, last_block), 0)

    def latent_map(c, j):
        return (0, 0)

    kernel = functools.partial(_vae_loss_kernel, tile_r=tile_r,
                               rows_valid=rows, blocks_per_split=bps)

    cost = pl.CostEstimate(
        flops=3 * rows * LANES + 5 * rows_z * LANES,
        transcendentals=rows_z * LANES,
        bytes_accessed=(recon_slab.size * recon_slab.dtype.itemsize
                        + x_slab.size * x_slab.dtype.itemsize
                        + mu_slab.size * mu_slab.dtype.itemsize
                        + lv_slab.size * lv_slab.dtype.itemsize
                        + num_splits * SUBLANES * LANES * 4))

    out = pl.pallas_call(
        kernel,
        out_shape=jax.ShapeDtypeStruct((num_splits * SUBLANES, LANES),
                                       jnp.float32),
        grid_spec=pltpu.PrefetchScalarGridSpec(
            num_scalar_prefetch=0,
            grid=(num_splits, bps),
            in_specs=[
                pl.BlockSpec((tile_r, LANES), img_map),
                pl.BlockSpec((tile_r, LANES), img_map),
                # Latents are tiny for any realistic VAE; fetched once.
                # TODO(synk): stream mu/logvar like the images if they ever
                # grow to multi-MiB (VMEM residency concern on v7x).
                pl.BlockSpec((rows_z, LANES), latent_map),
                pl.BlockSpec((rows_z, LANES), latent_map),
            ],
            out_specs=pl.BlockSpec((SUBLANES, LANES), lambda c, j: (c, 0)),
            scratch_shapes=[pltpu.VMEM((SUBLANES, LANES), jnp.float32)],
        ),
        compiler_params=pltpu.CompilerParams(
            dimension_semantics=("parallel", "arbitrary"),
            vmem_limit_bytes=VMEM_LIMIT_BYTES),
        cost_estimate=cost,
    )(recon_slab, x_slab, mu_slab, lv_slab)

    per_split = out.reshape(num_splits, SUBLANES, LANES)
    sse = jnp.sum(per_split[:, 0, 0])            # raw SSE across splits
    if recon_tail is not None:
        sse = sse + jnp.sum((recon_tail.astype(jnp.float32)
                             - x_tail.astype(jnp.float32)) ** 2)
    mse = sse / n_x
    kld = -0.5 * per_split[0, 0, 1] / n_z
    return mse + kld, mse, kld


if __name__ == "__main__":
    key = jax.random.PRNGKey(0)
    k1, k2, k3, k4 = jax.random.split(key, 4)

    # Shapes consistent with a VAE forward pass:
    #   images (NCHW) = (2, 4, 16, 16), latent (N, Z) = (2, 32)
    x = jax.random.normal(k1, (2, 4, 16, 16), jnp.float32)
    recon = x + 0.1 * jax.random.normal(k2, (2, 4, 16, 16), jnp.float32)
    mu = 0.5 * jax.random.normal(k3, (2, 32), jnp.float32)
    logvar = 0.3 * jax.random.normal(k4, (2, 32), jnp.float32)

    total, mse, kld = jax.block_until_ready(vae_loss(recon, x, mu, logvar))

    # Pure-JAX reference (semantics of the PyTorch module).
    ref_mse = jnp.mean((recon - x) ** 2)
    ref_kld = -0.5 * jnp.mean(1.0 + logvar - mu ** 2 - jnp.exp(logvar))
    ref_total = ref_mse + ref_kld

    np.testing.assert_allclose(np.asarray(mse), np.asarray(ref_mse),
                               rtol=1e-5, atol=1e-6)
    np.testing.assert_allclose(np.asarray(kld), np.asarray(ref_kld),
                               rtol=1e-5, atol=1e-6)
    np.testing.assert_allclose(np.asarray(total), np.asarray(ref_total),
                               rtol=1e-5, atol=1e-6)

    print("KERNEL_OK")
</pallas_src>

<mosaic_0001>
module attributes {stable_mosaic.version = 11 : i64} {
  func.func @_vae_loss_kernel(%arg0: i32, %arg1: i32, %arg2: memref<16x128xf32, #tpu.memory_space<vmem>>, %arg3: memref<16x128xf32, #tpu.memory_space<vmem>>, %arg4: memref<8x128xf32, #tpu.memory_space<vmem>>, %arg5: memref<8x128xf32, #tpu.memory_space<vmem>>, %arg6: memref<8x128xf32, #tpu.memory_space<vmem>>, %arg7: memref<8x128xf32, #tpu.memory_space<vmem>>) attributes {dimension_semantics = [#tpu.dimension_semantics<parallel>, #tpu.dimension_semantics<arbitrary>], iteration_bounds = array<i64: 1, 1>, scalar_prefetch = 0 : i64, scratch_operands = 1 : i64, tpu.core_type = #tpu.core_type<tc>, window_params = [{transform_indices = @transform_0, window_bounds = array<i64: 16, 128>}, {transform_indices = @transform_1, window_bounds = array<i64: 16, 128>}, {pipeline_mode = #tpu.pipeline_mode<synchronous>, transform_indices = @transform_2, window_bounds = array<i64: 8, 128>}, {pipeline_mode = #tpu.pipeline_mode<synchronous>, transform_indices = @transform_3, window_bounds = array<i64: 8, 128>}, {transform_indices = @transform_4, window_bounds = array<i64: 8, 128>}]} {
    %c0_i32 = arith.constant 0 : i32
    %0 = arith.cmpi eq, %arg1, %c0_i32 : i32
    %1 = arith.extui %0 : i1 to i32
    %c0_i32_0 = arith.constant 0 : i32
    %2 = arith.cmpi ne, %1, %c0_i32_0 : i32
    scf.if %2 {
      %cst = arith.constant 0.000000e+00 : f32
      %21 = vector.broadcast %cst : f32 to vector<8x128xf32>
      %c0 = arith.constant 0 : index
      %c0_11 = arith.constant 0 : index
      %22 = vector.load %arg7[%c0, %c0_11] : memref<8x128xf32, #tpu.memory_space<vmem>>, vector<8x128xf32>
      tpu.vector_store %arg7[%c0, %c0_11], %21 {strides = array<i32>} : memref<8x128xf32, #tpu.memory_space<vmem>>, vector<8x128xf32>,
    } else {
    }
    %c1_i32 = arith.constant 1 : i32
    %3 = arith.muli %arg0, %c1_i32 : i32
    %4 = arith.addi %3, %arg1 : i32
    %c16_i32 = arith.constant 16 : i32
    %5 = arith.muli %4, %c16_i32 : i32
    %c16_i32_1 = arith.constant 16 : i32
    %6 = arith.subi %c16_i32_1, %5 : i32
    %c16_i32_2 = arith.constant 16 : i32
    %7 = arith.cmpi sge, %6, %c16_i32_2 : i32
    %8 = arith.extui %7 : i1 to i32
    %c0_i32_3 = arith.constant 0 : i32
    %9 = arith.cmpi ne, %8, %c0_i32_3 : i32
    scf.if %9 {
      %c0 = arith.constant 0 : index
      %c0_11 = arith.constant 0 : index
      %21 = vector.load %arg2[%c0, %c0_11] : memref<16x128xf32, #tpu.memory_space<vmem>>, vector<16x128xf32>
      %c0_12 = arith.constant 0 : index
      %c0_13 = arith.constant 0 : index
      %22 = vector.load %arg3[%c0_12, %c0_13] : memref<16x128xf32, #tpu.memory_space<vmem>>, vector<16x128xf32>
      %23 = arith.subf %21, %22 : vector<16x128xf32>
      %24 = arith.mulf %23, %23 : vector<16x128xf32>
      %c0_14 = arith.constant 0 : index
      %c0_15 = arith.constant 0 : index
      %25 = vector.load %arg7[%c0_14, %c0_15] : memref<8x128xf32, #tpu.memory_space<vmem>>, vector<8x128xf32>
      %26 = vector.shape_cast %24 : vector<16x128xf32> to vector<2x8x128xf32>
      %cst = arith.constant dense<0.000000e+00> : vector<8x128xf32>
      %27 = vector.multi_reduction <add>, %26, %cst [0] : vector<2x8x128xf32> to vector<8x128xf32>
      %28 = arith.addf %25, %27 : vector<8x128xf32>
      %c0_16 = arith.constant 0 : index
      %c0_17 = arith.constant 0 : index
      %29 = vector.load %arg7[%c0_16, %c0_17] : memref<8x128xf32, #tpu.memory_space<vmem>>, vector<8x128xf32>
      tpu.vector_store %arg7[%c0_16, %c0_17], %28 {strides = array<i32>} : memref<8x128xf32, #tpu.memory_space<vmem>>, vector<8x128xf32>,
    } else {
    }
    %c16_i32_4 = arith.constant 16 : i32
    %10 = arith.cmpi slt, %6, %c16_i32_4 : i32
    %11 = arith.extui %10 : i1 to i32
    %c0_i32_5 = arith.constant 0 : i32
    %12 = arith.cmpi ne, %11, %c0_i32_5 : i32
    scf.if %12 {
      %c0 = arith.constant 0 : index
      %c0_11 = arith.constant 0 : index
      %21 = vector.load %arg2[%c0, %c0_11] : memref<16x128xf32, #tpu.memory_space<vmem>>, vector<16x128xf32>
      %c0_12 = arith.constant 0 : index
      %c0_13 = arith.constant 0 : index
      %22 = vector.load %arg3[%c0_12, %c0_13] : memref<16x128xf32, #tpu.memory_space<vmem>>, vector<16x128xf32>
      %23 = arith.subf %21, %22 : vector<16x128xf32>
      %24 = arith.mulf %23, %23 : vector<16x128xf32>
      %25 = tpu.iota {dimensions = array<i32: 0>} : vector<16x128xi32>
      %c0_i32_14 = arith.constant 0 : i32
      %26 = vector.broadcast %c0_i32_14 : i32 to vector<16x128xi32>
      %27 = arith.addi %25, %26 : vector<16x128xi32>
      %28 = vector.broadcast %6 : i32 to vector<16x128xi32>
      %29 = arith.cmpi slt, %27, %28 : vector<16x128xi32>
      %cst = arith.constant 0.000000e+00 : f32
      %30 = vector.broadcast %cst : f32 to vector<16x128xf32>
      %31 = arith.select %29, %24, %30 : vector<16x128xi1>, vector<16x128xf32>
      %c0_15 = arith.constant 0 : index
      %c0_16 = arith.constant 0 : index
      %32 = vector.load %arg7[%c0_15, %c0_16] : memref<8x128xf32, #tpu.memory_space<vmem>>, vector<8x128xf32>
      %33 = vector.shape_cast %31 : vector<16x128xf32> to vector<2x8x128xf32>
      %cst_17 = arith.constant dense<0.000000e+00> : vector<8x128xf32>
      %34 = vector.multi_reduction <add>, %33, %cst_17 [0] : vector<2x8x128xf32> to vector<8x128xf32>
      %35 = arith.addf %32, %34 : vector<8x128xf32>
      %c0_18 = arith.constant 0 : index
      %c0_19 = arith.constant 0 : index
      %36 = vector.load %arg7[%c0_18, %c0_19] : memref<8x128xf32, #tpu.memory_space<vmem>>, vector<8x128xf32>
      tpu.vector_store %arg7[%c0_18, %c0_19], %35 {strides = array<i32>} : memref<8x128xf32, #tpu.memory_space<vmem>>, vector<8x128xf32>,
    } else {
    }
    %c0_i32_6 = arith.constant 0 : i32
    %13 = arith.cmpi eq, %arg1, %c0_i32_6 : i32
    %14 = arith.extui %13 : i1 to i32
    %c0_i32_7 = arith.constant 0 : i32
    %15 = arith.cmpi ne, %14, %c0_i32_7 : i32
    scf.if %15 {
      %21 = tpu.iota {dimensions = array<i32: 0>} : vector<8x128xi32>
      %22 = tpu.iota {dimensions = array<i32: 1>} : vector<8x128xi32>
      %c0 = arith.constant 0 : index
      %c0_11 = arith.constant 0 : index
      %23 = vector.load %arg7[%c0, %c0_11] : memref<8x128xf32, #tpu.memory_space<vmem>>, vector<8x128xf32>
      %24 = vector.shape_cast %23 : vector<8x128xf32> to vector<1x8x128xf32>
      %cst = arith.constant dense<0.000000e+00> : vector<1xf32>
      %25 = vector.multi_reduction <add>, %24, %cst [1, 2] : vector<1x8x128xf32> to vector<1xf32>
      %26 = vector.shape_cast %25 : vector<1xf32> to vector<1x1x1xf32>
      %27 = vector.extract %26[0, 0, 0] : f32 from vector<1x1x1xf32>
      %c0_i32_12 = arith.constant 0 : i32
      %28 = vector.broadcast %c0_i32_12 : i32 to vector<8x128xi32>
      %29 = arith.cmpi eq, %21, %28 : vector<8x128xi32>
      %c0_i32_13 = arith.constant 0 : i32
      %30 = vector.broadcast %c0_i32_13 : i32 to vector<8x128xi32>
      %31 = arith.cmpi eq, %22, %30 : vector<8x128xi32>
      %32 = arith.andi %29, %31 : vector<8x128xi1>
      %cst_14 = arith.constant 0.000000e+00 : f32
      %33 = vector.broadcast %27 : f32 to vector<8x128xf32>
      %34 = vector.broadcast %cst_14 : f32 to vector<8x128xf32>
      %35 = arith.select %32, %33, %34 : vector<8x128xi1>, vector<8x128xf32>
      %c0_15 = arith.constant 0 : index
      %c0_16 = arith.constant 0 : index
      %36 = vector.load %arg6[%c0_15, %c0_16] : memref<8x128xf32, #tpu.memory_space<vmem>>, vector<8x128xf32>
      tpu.vector_store %arg6[%c0_15, %c0_16], %35 {strides = array<i32>} : memref<8x128xf32, #tpu.memory_space<vmem>>, vector<8x128xf32>,
    } else {
    }
    %c0_i32_8 = arith.constant 0 : i32
    %16 = arith.cmpi eq, %arg1, %c0_i32_8 : i32
    %c0_i32_9 = arith.constant 0 : i32
    %17 = arith.cmpi eq, %arg0, %c0_i32_9 : i32
    %18 = arith.andi %16, %17 : i1
    %19 = arith.extui %18 : i1 to i32
    %c0_i32_10 = arith.constant 0 : i32
    %20 = arith.cmpi ne, %19, %c0_i32_10 : i32
    scf.if %20 {
      %21 = tpu.iota {dimensions = array<i32: 0>} : vector<8x128xi32>
      %22 = tpu.iota {dimensions = array<i32: 1>} : vector<8x128xi32>
      %c0 = arith.constant 0 : index
      %c0_11 = arith.constant 0 : index
      %23 = vector.load %arg4[%c0, %c0_11] : memref<8x128xf32, #tpu.memory_space<vmem>>, vector<8x128xf32>
      %c0_12 = arith.constant 0 : index
      %c0_13 = arith.constant 0 : index
      %24 = vector.load %arg5[%c0_12, %c0_13] : memref<8x128xf32, #tpu.memory_space<vmem>>, vector<8x128xf32>
      %cst = arith.constant 1.000000e+00 : f32
      %25 = vector.broadcast %cst : f32 to vector<8x128xf32>
      %26 = arith.addf %25, %24 : vector<8x128xf32>
      %27 = arith.mulf %23, %23 : vector<8x128xf32>
      %28 = arith.subf %26, %27 : vector<8x128xf32>
      %29 = math.exp %24 : vector<8x128xf32>
      %30 = arith.subf %28, %29 : vector<8x128xf32>
      %31 = vector.shape_cast %30 : vector<8x128xf32> to vector<1x8x128xf32>
      %cst_14 = arith.constant dense<0.000000e+00> : vector<1xf32>
      %32 = vector.multi_reduction <add>, %31, %cst_14 [1, 2] : vector<1x8x128xf32> to vector<1xf32>
      %33 = vector.shape_cast %32 : vector<1xf32> to vector<1x1x1xf32>
      %34 = vector.extract %33[0, 0, 0] : f32 from vector<1x1x1xf32>
      %c0_15 = arith.constant 0 : index
      %c0_16 = arith.constant 0 : index
      %35 = vector.load %arg6[%c0_15, %c0_16] : memref<8x128xf32, #tpu.memory_space<vmem>>, vector<8x128xf32>
      %c0_i32_17 = arith.constant 0 : i32
      %36 = vector.broadcast %c0_i32_17 : i32 to vector<8x128xi32>
      %37 = arith.cmpi eq, %21, %36 : vector<8x128xi32>
      %c1_i32_18 = arith.constant 1 : i32
      %38 = vector.broadcast %c1_i32_18 : i32 to vector<8x128xi32>
      %39 = arith.cmpi eq, %22, %38 : vector<8x128xi32>
      %40 = arith.andi %37, %39 : vector<8x128xi1>
      %cst_19 = arith.constant 0.000000e+00 : f32
      %41 = vector.broadcast %34 : f32 to vector<8x128xf32>
      %42 = vector.broadcast %cst_19 : f32 to vector<8x128xf32>
      %43 = arith.select %40, %41, %42 : vector<8x128xi1>, vector<8x128xf32>
      %44 = arith.addf %35, %43 : vector<8x128xf32>
      %c0_20 = arith.constant 0 : index
      %c0_21 = arith.constant 0 : index
      %45 = vector.load %arg6[%c0_20, %c0_21] : memref<8x128xf32, #tpu.memory_space<vmem>>, vector<8x128xf32>
      tpu.vector_store %arg6[%c0_20, %c0_21], %44 {strides = array<i32>} : memref<8x128xf32, #tpu.memory_space<vmem>>, vector<8x128xf32>,
    } else {
    }
    return
  }
  func.func @transform_0(%arg0: i32, %arg1: i32) -> (i32, i32) {
    %c1_i32 = arith.constant 1 : i32
    %0 = arith.muli %arg0, %c1_i32 : i32
    %1 = arith.addi %0, %arg1 : i32
    %c0_i32 = arith.constant 0 : i32
    %2 = arith.minsi %1, %c0_i32 : i32
    %c0_i32_0 = arith.constant 0 : i32
    %c0_i32_1 = arith.constant 0 : i32
    return %2, %c0_i32_0 : i32, i32
  }
  func.func @transform_1(%arg0: i32, %arg1: i32) -> (i32, i32) {
    %c1_i32 = arith.constant 1 : i32
    %0 = arith.muli %arg0, %c1_i32 : i32
    %1 = arith.addi %0, %arg1 : i32
    %c0_i32 = arith.constant 0 : i32
    %2 = arith.minsi %1, %c0_i32 : i32
    %c0_i32_0 = arith.constant 0 : i32
    %c0_i32_1 = arith.constant 0 : i32
    return %2, %c0_i32_0 : i32, i32
  }
  func.func @transform_2(%arg0: i32, %arg1: i32) -> (i32, i32) {
    %c0_i32 = arith.constant 0 : i32
    %c0_i32_0 = arith.constant 0 : i32
    %c0_i32_1 = arith.constant 0 : i32
    return %c0_i32, %c0_i32_0 : i32, i32
  }
  func.func @transform_3(%arg0: i32, %arg1: i32) -> (i32, i32) {
    %c0_i32 = arith.constant 0 : i32
    %c0_i32_0 = arith.constant 0 : i32
    %c0_i32_1 = arith.constant 0 : i32
    return %c0_i32, %c0_i32_0 : i32, i32
  }
  func.func @transform_4(%arg0: i32, %arg1: i32) -> (i32, i32) {
    %c0_i32 = arith.constant 0 : i32
    %c0_i32_0 = arith.constant 0 : i32
    return %arg0, %c0_i32 : i32, i32
  }
}

</mosaic_0001>

<llo_original>
// kernel: vae_loss.1
$region0: #{vae_loss.1}
  #allocation0 [shape = 'u32[]', space=smem, size = 0x4, offset = 0x4, fixed_abs, tag = 'smem constant byte address 0x4 - core index']
  #allocation1 [shape = 'u32[144,128]{1,0:T(1,128)}', space=vmem, size = 0x12000, scoped, tag = 'internal scratch']
  #allocation2 [shape = 'f32[8,128]{1,0:T(8,128)}', space=vmem, size = 0x1000, scoped, tag = 'scratch operand']
  %s0 = inlined_call_operand.vmem [shape: f32[16,128], index: 0, kind: input, shape index: {}]
  %s1 = inlined_call_operand.vmem [shape: f32[16,128], index: 1, kind: input, shape index: {}]
  %s2 = inlined_call_operand.vmem [shape: f32[8,128], index: 2, kind: input, shape index: {}]
  %s3 = inlined_call_operand.vmem [shape: f32[8,128], index: 3, kind: input, shape index: {}]
  %s4 = inlined_call_operand.vmem [shape: f32[8,128], index: 4, kind: output, shape index: {}]
  %s5 = sld [smem:[#allocation0]]
  $region46: #{vae_loss.1} parent=0
    _
  %s7 = ssub.s32 1, %s5
  %s8 = scalar_select 0, %s7, %s5
  // Predicated region
  $region2: #{vae_loss.1} parent=0 // pred_check
    _
  $region3: #{vae_loss.1} parent=0 // pred_check_branch
    %10 = sbr.rel (0) target = $region5
  $region4: #{vae_loss.1} parent=0 // pred_region
    %s11 = sadd.s32 0, 0
    %p12 = scmp.lt.s32.totalorder %s11, 0
    %s13 = scalar_select %p12, %s11, 0
    %s14 = smul.u32 2, %s13
    %p15 = scmp.lt.s32.totalorder %s14, 1
    %s16 = scalar_select %p15, %s14, 1
    %s17 = smul.addr %s16, 8
    %s18 = scalar_lea.vmem %s0, %s17
    %s19 = sadd.s32 0, 0
    %p20 = scmp.lt.s32.totalorder %s19, 0
    %s21 = scalar_select %p20, %s19, 0
    %s22 = smul.u32 2, %s21
  $region5: #{vae_loss.1} parent=0 // pred_fallthru
    _
  // Predicated region
  $region6: #{vae_loss.1} parent=0 // pred_check
    _
  $region7: #{vae_loss.1} parent=0 // pred_check_branch
    %24 = sbr.rel (0) target = $region9
  $region8: #{vae_loss.1} parent=0 // pred_region
    %s25 = sadd.s32 0, 0
    %p26 = scmp.lt.s32.totalorder %s25, 0
    %s27 = scalar_select %p26, %s25, 0
    %s28 = smul.u32 2, %s27
    %p29 = scmp.lt.s32.totalorder %s28, 1
    %s30 = scalar_select %p29, %s28, 1
    %s31 = smul.addr %s30, 8
    %s32 = scalar_lea.vmem %s1, %s31
    %s33 = sadd.s32 0, 0
    %p34 = scmp.lt.s32.totalorder %s33, 0
    %s35 = scalar_select %p34, %s33, 0
    %s36 = smul.u32 2, %s35
  $region9: #{vae_loss.1} parent=0 // pred_fallthru
    _
  // Predicated region
  $region10: #{vae_loss.1} parent=0 // pred_check
    _
  $region11: #{vae_loss.1} parent=0 // pred_check_branch
    %38 = sbr.rel (0) target = $region13
  $region12: #{vae_loss.1} parent=0 // pred_region
    _
  $region13: #{vae_loss.1} parent=0 // pred_fallthru
    _
  // Predicated region
  $region14: #{vae_loss.1} parent=0 // pred_check
    _
  $region15: #{vae_loss.1} parent=0 // pred_check_branch
    %40 = sbr.rel (0) target = $region17
  $region16: #{vae_loss.1} parent=0 // pred_region
    _
  $region17: #{vae_loss.1} parent=0 // pred_fallthru
    _
  %s41 = sadd.s32 0, 0
  %p42 = scmp.lt.s32.totalorder %s41, 0
  %s43 = scalar_select %p42, %s41, 0
  %s44 = smul.u32 2, %s43
  %p45 = scmp.lt.s32.totalorder %s44, 1
  %s46 = scalar_select %p45, %s44, 1
  %s47 = smul.addr %s46, 8
  %s48 = scalar_lea.vmem %s0, %s47
  %s49 = sadd.s32 0, 0
  %p50 = scmp.lt.s32.totalorder %s49, 0
  %s51 = scalar_select %p50, %s49, 0
  %s52 = smul.u32 2, %s51
  %p53 = scmp.lt.s32.totalorder %s52, 1
  %s54 = scalar_select %p53, %s52, 1
  %s55 = smul.addr %s54, 8
  %s56 = scalar_lea.vmem %s1, %s55
  %s57 = sadd.s32 0, 0
  %p58 = scmp.lt.s32.totalorder %s57, 0
  %s59 = scalar_select %p58, %s57, 0
  %s60 = smul.u32 2, %s59
  %p61 = scmp.lt.s32.totalorder %s60, 1
  %s62 = scalar_select %p61, %s60, 1
  %s63 = smul.addr %s62, 8
  %s64 = scalar_lea.vmem %s0, %s63
  %s65 = sadd.s32 0, 0
  %p66 = scmp.lt.s32.totalorder %s65, 0
  %s67 = scalar_select %p66, %s65, 0
  %s68 = smul.u32 2, %s67
  %s69 = sadd.s32 0, 0
  %p70 = scmp.lt.s32.totalorder %s69, 0
  %s71 = scalar_select %p70, %s69, 0
  %s72 = smul.u32 2, %s71
  %p73 = scmp.lt.s32.totalorder %s72, 1
  %s74 = scalar_select %p73, %s72, 1
  %s75 = smul.addr %s74, 8
  %s76 = scalar_lea.vmem %s1, %s75
  %s77 = sadd.s32 0, 0
  %p78 = scmp.lt.s32.totalorder %s77, 0
  %s79 = scalar_select %p78, %s77, 0
  %s80 = smul.u32 2, %s79
  %p81 = scmp.eq.s32.totalorder 0, 0
  // Predicated region
  $region18: #{vae_loss.1} parent=0 // pred_check
    %p82 = pneg %p81
  $region19: #{vae_loss.1} parent=0 // pred_check_branch
    %84 = sbr.rel (%p82) target = $region21
  $region20: #{vae_loss.1} parent=0 // pred_region
    %85 = vst [vmem:[#allocation2] sm:$0xff] 0.0
  $region21: #{vae_loss.1} parent=0 // pred_fallthru
    _
  %s86 = sadd.s32 0, 0
  %s87 = smul.u32 %s86, 16
  %s88 = ssub.s32 16, %s87
  %p89 = scmp.ge.s32.totalorder %s88, 16
  // Predicated region
  $region22: #{vae_loss.1} parent=0 // pred_check
    %p90 = pneg %p89
  $region23: #{vae_loss.1} parent=0 // pred_check_branch
    %92 = sbr.rel (%p90) target = $region25
  $region24: #{vae_loss.1} parent=0 // pred_region
    %v93 = vld [vmem:[%s64] sm:$0xff]
    %v94 = vld [vmem:[%s64 + $0x8] sm:$0xff]
    %v95 = vld [vmem:[%s76] sm:$0xff]
    %v96 = vld [vmem:[%s76 + $0x8] sm:$0xff]
    %v97 = vsub.f32 %v93, %v95
    %v98 = vsub.f32 %v94, %v96
    %v99 = vmul.f32 %v97, %v97
    %v100 = vmul.f32 %v98, %v98
    %v101 = vld [vmem:[#allocation2] sm:$0xff]
    %v102 = vadd.f32 %v99, %v100
    %v103 = vadd.f32 %v101, %v102
    %104 = vst [vmem:[#allocation2] sm:$0xff] %v103
  $region25: #{vae_loss.1} parent=0 // pred_fallthru
    _
  %p105 = scmp.lt.s32.totalorder %s88, 16
  // Predicated region
  $region26: #{vae_loss.1} parent=0 // pred_check
    %p106 = pneg %p105
  $region27: #{vae_loss.1} parent=0 // pred_check_branch
    %108 = sbr.rel (%p106) target = $region29
  $region28: #{vae_loss.1} parent=0 // pred_region
    %v109 = vld [vmem:[%s64] sm:$0xff]
    %v110 = vld [vmem:[%s64 + $0x8] sm:$0xff]
    %v111 = vld [vmem:[%s76] sm:$0xff]
    %v112 = vld [vmem:[%s76 + $0x8] sm:$0xff]
    %v113 = vsub.f32 %v109, %v111
    %v114 = vsub.f32 %v110, %v112
    %v115 = vmul.f32 %v113, %v113
    %v116 = vmul.f32 %v114, %v114
    %v117 = vlaneseq
    %v118 = vshrl.u32 %v117, 7
    %v119 = vadd.s32 %v118, 8
    %v120 = vstv %s88
    %vm121 = vcmp.lt.s32.totalorder %v118, %v120
    %vm122 = vcmp.lt.s32.totalorder %v119, %v120
    %v123 = vsel %vm121, %v115, 0.0
    %v124 = vsel %vm122, %v116, 0.0
    %v125 = vld [vmem:[#allocation2] sm:$0xff]
    %v126 = vadd.f32 %v123, %v124
    %v127 = vadd.f32 %v125, %v126
    %128 = vst [vmem:[#allocation2] sm:$0xff] %v127
  $region29: #{vae_loss.1} parent=0 // pred_fallthru
    _
  // Predicated region
  $region30: #{vae_loss.1} parent=0 // pred_check
    %p129 = pneg %p81
  $region31: #{vae_loss.1} parent=0 // pred_check_branch
    %131 = sbr.rel (%p129) target = $region33
  $region32: #{vae_loss.1} parent=0 // pred_region
    %v132 = vlaneseq
    %v133 = vshrl.u32 %v132, 7
    %v134 = vlaneseq
    %v135 = vand.u32 %v134, 127
    %v136 = vld [vmem:[#allocation2] sm:$0xff]
    %137 = vadd.xlane.f32.xlu0 %v136
    %v138 = vpop.xlane.xlu0 %137
    %v139 = vrot.slane %v138, 4
    %v140 = vadd.f32 %v138, %v139
    %v141 = vrot.slane %v140, 2
    %v142 = vadd.f32 %v140, %v141
    %v143 = vrot.slane %v142, 1
    %v144 = vadd.f32 %v142, %v143
    %s145 = vtos %v144
    %vm146 = vcmp.eq.s32.totalorder %v133, 0
    %vm147 = vcmp.eq.s32.totalorder %v135, 0
    %vm148 = vmand %vm146, %vm147
    %v149 = vstv %s145
    %v150 = vsel %vm148, %v149, 0.0
    %151 = vst [vmem:[%s4] sm:$0xff] %v150
  $region33: #{vae_loss.1} parent=0 // pred_fallthru
    _
  %p152 = scmp.eq.s32.totalorder 0, 0
  %p153 = pnand %p81, %p152
  %p154 = pneg %p153
  // Predicated region
  $region34: #{vae_loss.1} parent=0 // pred_check
    _
  $region35: #{vae_loss.1} parent=0 // pred_check_branch
    %156 = sbr.rel (%p153) target = $region37
  $region36: #{vae_loss.1} parent=0 // pred_region
    %v157 = vlaneseq
    %v158 = vshrl.u32 %v157, 7
    %v159 = vlaneseq
    %v160 = vand.u32 %v159, 127
    %v161 = vld [vmem:[%s2] sm:$0xff]
    %v162 = vld [vmem:[%s3] sm:$0xff]
    %v163 = vadd.f32 %v162, 1.0
    %v164 = vmul.f32 %v161, %v161
    %v165 = vsub.f32 %v163, %v164
    %v166 = vmul.f32 %v162, 1.442695
    %v167 = vpow.pop %v166
    %v168 = vsub.f32 %v165, %v167
    %169 = vadd.xlane.f32.xlu0 %v168
    %v170 = vpop.xlane.xlu0 %169
    %v171 = vrot.slane %v170, 4
    %v172 = vadd.f32 %v170, %v171
    %v173 = vrot.slane %v172, 2
    %v174 = vadd.f32 %v172, %v173
    %v175 = vrot.slane %v174, 1
    %v176 = vadd.f32 %v174, %v175
    %s177 = vtos %v176
    %v178 = vld [vmem:[%s4] sm:$0xff]
    %vm179 = vcmp.eq.s32.totalorder %v158, 0
    %vm180 = vcmp.eq.s32.totalorder %v160, 1
    %vm181 = vmand %vm179, %vm180
    %v182 = vstv %s177
    %v183 = vsel %vm181, %v182, 0.0
    %v184 = vadd.f32 %v178, %v183
    %185 = vst [vmem:[%s4] sm:$0xff] %v184
  $region37: #{vae_loss.1} parent=0 // pred_fallthru
    _
  // Predicated region
  $region38: #{vae_loss.1} parent=0 // pred_check
    _
  $region39: #{vae_loss.1} parent=0 // pred_check_branch
    %187 = sbr.rel (0) target = $region41
  $region40: #{vae_loss.1} parent=0 // pred_region
    _
  $region41: #{vae_loss.1} parent=0 // pred_fallthru
    _
  // Predicated region
  $region42: #{vae_loss.1} parent=0 // pred_check
    _
  $region43: #{vae_loss.1} parent=0 // pred_check_branch
    %189 = sbr.rel (0) target = $region45
  $region44: #{vae_loss.1} parent=0 // pred_region
    _
  $region45: #{vae_loss.1} parent=0 // pred_fallthru
    _

</llo_original>
